<compile_context>
chip_gen: v6e
topology: v6e:2x2x1
jax: 0.10.0
libtpu: 0.0.40
codegen_flags: <defaults>
</compile_context>

<pallas_src>
import functools
from typing import NamedTuple, Optional

import numpy as np
import jax
import jax.numpy as jnp
from jax.experimental import pallas as pl
from jax.experimental.pallas import tpu as pltpu


_WEIGHT_BLOCK_BUDGET = 2 << 20   # resident block-diagonal weight group (bytes)
_XOUT_VMEM_BUDGET = 18 << 20     # double-buffered x + out tiles (bytes)
_VMEM_LIMIT_CAP = 48 << 20       # never request more scoped VMEM than this


def _pointwise_linear_kernel(x_ref, w_ref, b_ref, o_ref):
    # x_ref: (TN, TD*I)       activation slab covering TD parallel slices
    # w_ref: (1, TD*I, TD*J)  block-diagonal weights (resident across the N sweep)
    # b_ref: (1, TD*J)        bias tiled across the TD slices (f32, resident)
    # o_ref: (TN, TD*J)       lane-dense output slab
    acc = jnp.dot(x_ref[...], w_ref[0], preferred_element_type=jnp.float32)
    o_ref[...] = (acc + b_ref[...]).astype(o_ref.dtype)


def _round_up(x, m):
    return -(-x // m) * m


def _choose_group(D, I, J, weight_budget_bytes):
    """Pick (TD, I_pad, J_pad).

    TD parallel slices are fused into one block-diagonal (TD*I_pad, TD*J_pad)
    matmul per grid step.  Prefer the *largest* TD whose resident weight block
    stays under `weight_budget_bytes` and whose lane dims are dense without
    padding (multiples of 128, or the full flattened dims when TD == D).
    If no unpadded choice exists, pad the per-slice feature dims to 128
    (costs one extra pass over x/out in the wrapper; awkward shapes only).
    """
    def wbytes(td, i, j):
        return 4 * (td * i) * (td * j)

    divisors = [td for td in range(1, D + 1) if D % td == 0]

    unpadded = [
        td for td in divisors
        if (td == D or ((td * I) % 128 == 0 and (td * J) % 128 == 0))
        and wbytes(td, I, J) <= weight_budget_bytes
    ]
    if unpadded:
        return max(unpadded), I, J

    I_p, J_p = _round_up(I, 128), _round_up(J, 128)
    padded = [td for td in divisors if wbytes(td, I_p, J_p) <= weight_budget_bytes]
    # TODO(synk): if even TD=1 with padded dims exceeds the budget (huge I*J),
    # a K-split accumulation grid axis would be needed; not required here.
    td = max(padded) if padded else 1
    return td, I_p, J_p


def _choose_tn(N, row_bytes_2buf, *, tn_max, min_row_tiles):
    """Largest multiple-of-8 row tile under the VMEM budget / tn_max.

    Prefers a divisor of N (no padding) as long as it stays within 2x of the
    cap; otherwise returns the cap and the caller pads N up to a multiple.
    Caps the tile so at least `min_row_tiles` tiles exist along N (keeps both
    v7x TensorCores busy when the G axis is trivial).
    """
    cap = min(tn_max, _XOUT_VMEM_BUDGET // max(row_bytes_2buf, 1))
    cap = max(8, (cap // 8) * 8)
    if min_row_tiles > 1:
        cap = min(cap, max(8, (N // min_row_tiles) // 8 * 8))
    n_pad8 = _round_up(N, 8)
    if n_pad8 <= cap:
        return n_pad8
    for tn in range(cap, max(cap // 2, 8) - 1, -8):
        if N % tn == 0:
            return tn
    return cap   # caller pads N up to a multiple of TN


class PackedParams(NamedTuple):
    w_bd: jax.Array    # (G, TD*I_p, TD*J_p) block-diagonal weights
    b_flat: jax.Array  # (1, TD*J_p) float32 bias, tiled across the TD slices
    d: int
    i: int
    j: int
    td: int
    i_p: int
    j_p: int


def pack_params(weight, bias, *, compute_dtype: Optional[jnp.dtype] = None,
                weight_budget_bytes: int = _WEIGHT_BLOCK_BUDGET) -> PackedParams:
    """Precompute block-diagonal weights / tiled bias once.

    Hoist this out of the per-forward hot path when the same parameters are
    reused across many calls (inference loops).
    """
    D, I, J = weight.shape
    assert bias.shape[-1] == J
    TD, I_p, J_p = _choose_group(D, I, J, weight_budget_bytes)
    G = D // TD

    w = weight
    if (I_p, J_p) != (I, J):
        w = jnp.pad(w, ((0, 0), (0, I_p - I), (0, J_p - J)))
    if compute_dtype is not None:
        w = w.astype(compute_dtype)
    # w_bd[g, t*I_p + i, s*J_p + j] = weight[g*TD + t, i, j] * (t == s)
    eye = jnp.eye(TD, dtype=w.dtype)
    w_bd = jnp.einsum('gtij,ts->gtisj', w.reshape(G, TD, I_p, J_p), eye)
    w_bd = w_bd.reshape(G, TD * I_p, TD * J_p)

    b = bias.reshape(-1).astype(jnp.float32)   # bias is always added in f32
    if J_p != J:
        b = jnp.pad(b, (0, J_p - J))
    b_flat = jnp.tile(b.reshape(1, J_p), (1, TD))

    return PackedParams(w_bd, b_flat, D, I, J, TD, I_p, J_p)


def pointwise_linear_packed(inputs, packed: PackedParams, *, tn_max: int = 1024,
                            compute_dtype: Optional[jnp.dtype] = None,
                            out_dtype: Optional[jnp.dtype] = None):
    N, D, I = inputs.shape
    assert D == packed.d and I == packed.i, (inputs.shape, packed.d, packed.i)
    J, TD, I_p, J_p = packed.j, packed.td, packed.i_p, packed.j_p
    G = D // TD
    TDI, TDJ = TD * I_p, TD * J_p
    out_dtype = out_dtype if out_dtype is not None else inputs.dtype

    x = inputs
    if I_p != I:
        # Awkward feature dims: pad per-slice lanes (extra pass over x; rare path).
        x = jnp.pad(x, ((0, 0), (0, 0), (0, I_p - I)))
    if compute_dtype is not None:
        x = x.astype(compute_dtype)
    x_flat = x.reshape(N, D * I_p)             # free row-major reshape

    x_bytes = np.dtype(x_flat.dtype).itemsize
    o_bytes = np.dtype(out_dtype).itemsize
    w_bytes = np.dtype(packed.w_bd.dtype).itemsize

    # Row tile: as large as VMEM budget / tn_max allow; >= 2 tiles along N when
    # G == 1 so both v7x TensorCores get work (negligible cost on 1-TC chips).
    row_bytes_2buf = 2 * (TDI * x_bytes + TDJ * o_bytes)
    TN = _choose_tn(N, row_bytes_2buf, tn_max=tn_max,
                    min_row_tiles=2 if G == 1 else 1)
    N_pad = _round_up(N, TN)
    if N_pad != N:
        x_flat = jnp.pad(x_flat, ((0, N_pad - N), (0, 0)))

    footprint = (TN * (TDI * x_bytes + TDJ * o_bytes) * 2   # double-buffered x/out
                 + 2 * TDI * TDJ * w_bytes                  # resident weight group
                 + 2 * TDJ * 4)                             # bias
    vmem_limit = int(min(_VMEM_LIMIT_CAP, max(footprint + (2 << 20), 16 << 20)))

    out_flat = pl.pallas_call(
        _pointwise_linear_kernel,
        out_shape=jax.ShapeDtypeStruct((N_pad, D * J_p), out_dtype),
        grid_spec=pltpu.PrefetchScalarGridSpec(
            num_scalar_prefetch=0,
            grid=(G, N_pad // TN),   # N innermost -> weight/bias resident across N
            in_specs=[
                # NOTE: if xprof shows exposed DMA here, bump to pl.Buffered(3).
                pl.BlockSpec((TN, TDI), lambda g, n: (n, g)),
                pl.BlockSpec((1, TDI, TDJ), lambda g, n: (g, 0, 0)),
                pl.BlockSpec((1, TDJ), lambda g, n: (0, 0)),
            ],
            out_specs=pl.BlockSpec((TN, TDJ), lambda g, n: (n, g)),
        ),
        compiler_params=pltpu.CompilerParams(
            dimension_semantics=("parallel", "parallel"),
            vmem_limit_bytes=vmem_limit,
        ),
    )(x_flat, packed.w_bd, packed.b_flat)

    out = out_flat.reshape(N_pad, D, J_p)
    if N_pad != N or J_p != J:
        out = out[:N, :, :J]
    return out


def pointwise_linear(inputs, weight, bias, *, tn_max: int = 1024,
                     compute_dtype: Optional[jnp.dtype] = None,
                     out_dtype: Optional[jnp.dtype] = None,
                     weight_budget_bytes: int = _WEIGHT_BLOCK_BUDGET):
    """inputs: (N, D, I), weight: (D, I, J), bias: (1, 1, J) -> (N, D, J)."""
    packed = pack_params(weight, bias, compute_dtype=compute_dtype,
                         weight_budget_bytes=weight_budget_bytes)
    return pointwise_linear_packed(inputs, packed, tn_max=tn_max,
                                   compute_dtype=compute_dtype,
                                   out_dtype=out_dtype)


def init_params(key, num_parallel, num_inputs, num_outputs, dtype=jnp.float32):
    """Mirrors the PyTorch module exactly: U(-sqrt(I), sqrt(I)) for weight & bias."""
    kw, kb = jax.random.split(key)
    bound = num_inputs ** 0.5
    weight = jax.random.uniform(
        kw, (num_parallel, num_inputs, num_outputs),
        minval=-bound, maxval=bound, dtype=dtype)
    bias = jax.random.uniform(
        kb, (1, 1, num_outputs),
        minval=-bound, maxval=bound, dtype=dtype)
    return weight, bias


if __name__ == "__main__":
    key = jax.random.PRNGKey(0)
    ks = jax.random.split(key, 4)

    def run_case(case_key, N, D, I, J, compute_dtype=None, rtol=1e-5, atol=1e-4):
        k_x, k_p = jax.random.split(case_key)
        x = jax.random.normal(k_x, (N, D, I), dtype=jnp.float32)
        weight, bias = init_params(k_p, D, I, J)

        fn = jax.jit(functools.partial(pointwise_linear,
                                       compute_dtype=compute_dtype))
        out = jax.block_until_ready(fn(x, weight, bias))

        ref = jnp.einsum('ndi,dij->ndj', x, weight) + bias
        assert out.shape == (N, D, J), out.shape
        err = float(jnp.max(jnp.abs(out.astype(jnp.float32) - ref)))
        assert jnp.allclose(out.astype(jnp.float32), ref, atol=atol, rtol=rtol), err

    # Small shapes consistent with the module's forward (N, D, I) x (D, I, J):
    run_case(ks[0], N=512, D=4, I=16, J=32)    # TD = D = 4, G = 1, contiguous rows
    run_case(ks[1], N=128, D=16, I=16, J=32)   # TD = D = 16 (under weight budget)
    run_case(ks[2], N=100, D=3, I=7, J=5)      # awkward dims -> N padded to tile
    run_case(ks[3], N=256, D=8, I=16, J=32,    # bf16 traffic, f32 accumulation
             compute_dtype=jnp.bfloat16, rtol=2e-2, atol=5e-1)

    print("KERNEL_OK")
</pallas_src>

<mosaic_0001>
module attributes {stable_mosaic.version = 11 : i64} {
  func.func @_pointwise_linear_kernel(%arg0: i32, %arg1: i32, %arg2: memref<256x64xf32, #tpu.memory_space<vmem>>, %arg3: memref<1x64x128xf32, #tpu.memory_space<vmem>>, %arg4: memref<1x128xf32, #tpu.memory_space<vmem>>, %arg5: memref<256x128xf32, #tpu.memory_space<vmem>>) attributes {dimension_semantics = [#tpu.dimension_semantics<parallel>, #tpu.dimension_semantics<parallel>], iteration_bounds = array<i64: 1, 2>, scalar_prefetch = 0 : i64, scratch_operands = 0 : i64, tpu.core_type = #tpu.core_type<tc>, window_params = [{transform_indices = @transform_0, window_bounds = array<i64: 256, 64>}, {transform_indices = @transform_1, window_bounds = array<i64: 1, 64, 128>}, {pipeline_mode = #tpu.pipeline_mode<synchronous>, transform_indices = @transform_2, window_bounds = array<i64: 1, 128>}, {transform_indices = @transform_3, window_bounds = array<i64: 256, 128>}]} {
    %c0 = arith.constant 0 : index
    %c0_0 = arith.constant 0 : index
    %0 = vector.load %arg2[%c0, %c0_0] : memref<256x64xf32, #tpu.memory_space<vmem>>, vector<256x64xf32>
    %c0_1 = arith.constant 0 : index
    %c0_2 = arith.constant 0 : index
    %c0_3 = arith.constant 0 : index
    %1 = vector.load %arg3[%c0_1, %c0_2, %c0_3] : memref<1x64x128xf32, #tpu.memory_space<vmem>>, vector<1x64x128xf32>
    %2 = vector.shape_cast %1 : vector<1x64x128xf32> to vector<64x128xf32>
    %cst = arith.constant dense<0.000000e+00> : vector<256x128xf32>
    %3 = tpu.matmul %0, %2, %cst {dimension_numbers = #tpu.dot_dimension_numbers<[1], [0], [0], [1], [0, 0, 1, 1], [], []>} : vector<256x64xf32>, vector<64x128xf32>, vector<256x128xf32> -> vector<256x128xf32>
    %c0_4 = arith.constant 0 : index
    %c0_5 = arith.constant 0 : index
    %4 = vector.load %arg4[%c0_4, %c0_5] : memref<1x128xf32, #tpu.memory_space<vmem>>, vector<1x128xf32>
    %5 = vector.broadcast %4 : vector<1x128xf32> to vector<256x128xf32>
    %6 = arith.addf %3, %5 : vector<256x128xf32>
    %c0_6 = arith.constant 0 : index
    %c0_7 = arith.constant 0 : index
    %7 = vector.load %arg5[%c0_6, %c0_7] : memref<256x128xf32, #tpu.memory_space<vmem>>, vector<256x128xf32>
    tpu.vector_store %arg5[%c0_6, %c0_7], %6 {strides = array<i32>} : memref<256x128xf32, #tpu.memory_space<vmem>>, vector<256x128xf32>,
    return
  }
  func.func @transform_0(%arg0: i32, %arg1: i32) -> (i32, i32) {
    %c0_i32 = arith.constant 0 : i32
    return %arg1, %arg0 : i32, i32
  }
  func.func @transform_1(%arg0: i32, %arg1: i32) -> (i32, i32, i32) {
    %c0_i32 = arith.constant 0 : i32
    %c0_i32_0 = arith.constant 0 : i32
    %c0_i32_1 = arith.constant 0 : i32
    return %arg0, %c0_i32, %c0_i32_0 : i32, i32, i32
  }
  func.func @transform_2(%arg0: i32, %arg1: i32) -> (i32, i32) {
    %c0_i32 = arith.constant 0 : i32
    %c0_i32_0 = arith.constant 0 : i32
    %c0_i32_1 = arith.constant 0 : i32
    return %c0_i32, %c0_i32_0 : i32, i32
  }
  func.func @transform_3(%arg0: i32, %arg1: i32) -> (i32, i32) {
    %c0_i32 = arith.constant 0 : i32
    return %arg1, %arg0 : i32, i32
  }
}

</mosaic_0001>

<llo_original>
// kernel: pointwise_linear.1
$region0: #{pointwise_linear.1}
  #allocation0 [shape = 'u32[]', space=smem, size = 0x4, offset = 0x4, fixed_abs, tag = 'smem constant byte address 0x4 - core index']
  #allocation1 [shape = 'u32[144,128]{1,0:T(1,128)}', space=vmem, size = 0x12000, scoped, tag = 'internal scratch']
  %s0 = inlined_call_operand.vmem [shape: f32[512,64], index: 0, kind: input, shape index: {}]
  %s1 = inlined_call_operand.vmem [shape: f32[1,64,128], index: 1, kind: input, shape index: {}]
  %s2 = inlined_call_operand.vmem [shape: f32[1,128], index: 2, kind: input, shape index: {}]
  %s3 = inlined_call_operand.vmem [shape: f32[512,128], index: 3, kind: output, shape index: {}]
  %s4 = sld [smem:[#allocation0]]
  $region45: #{pointwise_linear.1} parent=0
    _
  %s6 = ssub.s32 1, %s4
  %s7 = scalar_select 0, %s6, %s4
  loop: start=0, step=1, limit=4
  $region2: #{pointwise_linear.1} parent=0 // loop_pre_header
    _
  $region3: #{pointwise_linear.1} parent=0 // loop_header
    %s9 = sphi 0, %s13
    %p10 = scmp.ge.s32.totalorder %s9, 4
    %s16 = sphi 0, %s28
    %s17 = sphi 0, %s24
    %s18 = sphi 0, %s16
    %s19 = sphi 0, %s17
    %s20 = sphi 0, %s18
    %s21 = sphi 0, %s19
    %s33 = sphi 0, %s35
    %s36 = sphi 0, %s33
    %s37 = sphi 0, %s36
    %s53 = sphi 0, %s37
    %s59 = sphi 0, %s61
    %s62 = sphi 0, %s59
    %s63 = sphi 0, %s62
    %s79 = sphi 0, %s63
    %s83 = sphi 0, %s83
    %s85 = sphi 0, %s83
    %s86 = sphi 0, %s85
    %s100 = sphi 0, %s86
    %s108 = sphi 0, %s110
    %s111 = sphi 0, %s108
    %s112 = sphi 0, %s111
    %s128 = sphi 0, %s112
  $region4: #{pointwise_linear.1} parent=0 // loop_header_branch
    %12 = sbr.rel (%p10) target = $region8
  $region5: #{pointwise_linear.1} parent=0 // loop_body
    %s14 = ssub.s32 %s9, 1
    %s15 = ssub.s32 %s9, 2
    %s22 = sadd.s32 1, %s17
    %p23 = scmp.ge.s32.totalorder %s22, 2
    %s24 = scalar_select %p23, 0, %s22
    %s25 = sadd.s32 1, %s16
    %s26 = scalar_select %p23, %s25, %s16
    %p27 = scmp.ge.s32.totalorder %s26, 1
    %s28 = scalar_select %p27, 0, %s26
    %s29 = ssub.s32 %s17, %s24
    %s30 = ssub.s32 %s16, %s28
    %s31 = sor.u32 %s29, %s30
    %p32 = scmp.eq.s32.totalorder %s31, 0
    %s34 = sadd.s32 %s33, 1
    %s35 = scalar_select %p32, %s33, %s34
    %p38 = pneg %p32
    %p39 = scmp.eq.s32.totalorder %s9, 1
    %p40 = por %p38, %p39
    %p41 = scmp.ne.s32.totalorder %s33, %s36
    %p42 = scmp.eq.s32.totalorder %s9, 0
    %p43 = por %p41, %p42
    %p44 = scmp.ne.s32.totalorder %s33, %s36
    %p45 = scmp.eq.s32.totalorder %s14, 1
    %p46 = por %p44, %p45
    %p47 = scmp.ne.s32.totalorder %s36, %s37
    %p48 = scmp.eq.s32.totalorder %s14, 0
    %p49 = por %p47, %p48
    %p50 = scmp.ne.s32.totalorder %s36, %s37
    %p51 = scmp.eq.s32.totalorder %s15, 1
    %p52 = por %p50, %p51
    %p54 = scmp.ne.s32.totalorder %s37, %s53
    %p55 = scmp.eq.s32.totalorder %s15, 0
    %p56 = por %p54, %p55
    %s57 = ssub.s32 %s16, %s28
    %p58 = scmp.eq.s32.totalorder %s57, 0
    %s60 = sadd.s32 %s59, 1
    %s61 = scalar_select %p58, %s59, %s60
    %p64 = pneg %p58
    %p65 = scmp.eq.s32.totalorder %s9, 1
    %p66 = por %p64, %p65
    %p67 = scmp.ne.s32.totalorder %s59, %s62
    %p68 = scmp.eq.s32.totalorder %s9, 0
    %p69 = por %p67, %p68
    %p70 = scmp.ne.s32.totalorder %s59, %s62
    %p71 = scmp.eq.s32.totalorder %s14, 1
    %p72 = por %p70, %p71
    %p73 = scmp.ne.s32.totalorder %s62, %s63
    %p74 = scmp.eq.s32.totalorder %s14, 0
    %p75 = por %p73, %p74
    %p76 = scmp.ne.s32.totalorder %s62, %s63
    %p77 = scmp.eq.s32.totalorder %s15, 1
    %p78 = por %p76, %p77
    %p80 = scmp.ne.s32.totalorder %s63, %s79
    %p81 = scmp.eq.s32.totalorder %s15, 0
    %p82 = por %p80, %p81
    %s84 = sadd.s32 %s83, 1
    %p87 = scmp.eq.s32.totalorder %s9, 1
    %p88 = scmp.ne.s32.totalorder %s83, %s85
    %p89 = scmp.eq.s32.totalorder %s9, 0
    %p90 = por %p88, %p89
    %p91 = scmp.ne.s32.totalorder %s83, %s85
    %p92 = scmp.eq.s32.totalorder %s14, 1
    %p93 = por %p91, %p92
    %p94 = scmp.ne.s32.totalorder %s85, %s86
    %p95 = scmp.eq.s32.totalorder %s14, 0
    %p96 = por %p94, %p95
    %p97 = scmp.ne.s32.totalorder %s85, %s86
    %p98 = scmp.eq.s32.totalorder %s15, 1
    %p99 = por %p97, %p98
    %p101 = scmp.ne.s32.totalorder %s86, %s100
    %p102 = scmp.eq.s32.totalorder %s15, 0
    %p103 = por %p101, %p102
    %s104 = ssub.s32 %s17, %s24
    %s105 = ssub.s32 %s16, %s28
    %s106 = sor.u32 %s104, %s105
    %p107 = scmp.eq.s32.totalorder %s106, 0
    %s109 = sadd.s32 %s108, 1
    %s110 = scalar_select %p107, %s108, %s109
    %p113 = pneg %p107
    %p114 = scmp.eq.s32.totalorder %s9, 1
    %p115 = por %p113, %p114
    %p116 = scmp.ne.s32.totalorder %s108, %s111
    %p117 = scmp.eq.s32.totalorder %s9, 0
    %p118 = por %p116, %p117
    %p119 = scmp.ne.s32.totalorder %s108, %s111
    %p120 = scmp.eq.s32.totalorder %s14, 1
    %p121 = por %p119, %p120
    %p122 = scmp.ne.s32.totalorder %s111, %s112
    %p123 = scmp.eq.s32.totalorder %s14, 0
    %p124 = por %p122, %p123
    %p125 = scmp.ne.s32.totalorder %s111, %s112
    %p126 = scmp.eq.s32.totalorder %s15, 1
    %p127 = por %p125, %p126
    %p129 = scmp.ne.s32.totalorder %s112, %s128
    %p130 = scmp.eq.s32.totalorder %s15, 0
    %p131 = por %p129, %p130
    %p132 = scmp.le.s32.totalorder 1, %s9
    %p133 = scmp.lt.s32.totalorder %s9, 3
    %p134 = pnand %p132, %p133
    %p135 = pneg %p134
    // Predicated region
    $region9: #{pointwise_linear.1} parent=5 // pred_check
      _
    $region10: #{pointwise_linear.1} parent=5 // pred_check_branch
      %137 = sbr.rel (%p134) target = $region12
    $region11: #{pointwise_linear.1} parent=5 // pred_region
      %s138 = ssub.s32 %s9, 1
      // Predicated region
      $region13: #{pointwise_linear.1} parent=11 // pred_check
        %p139 = pneg %p75
      $region14: #{pointwise_linear.1} parent=11 // pred_check_branch
        %141 = sbr.rel (%p139) target = $region16
      $region15: #{pointwise_linear.1} parent=11 // pred_region
        %p142 = scmp.lt.s32.totalorder %s18, 0
        %s143 = scalar_select %p142, %s18, 0
        %s144 = smul.addr %s143, 8
        %s145 = smul.addr %s144, 8
        %s146 = scalar_lea.vmem %s1, %s145
      $region16: #{pointwise_linear.1} parent=11 // pred_fallthru
        _
      // Predicated region
      $region17: #{pointwise_linear.1} parent=11 // pred_check
        %p147 = pneg %p96
      $region18: #{pointwise_linear.1} parent=11 // pred_check_branch
        %149 = sbr.rel (%p147) target = $region20
      $region19: #{pointwise_linear.1} parent=11 // pred_region
        _
      $region20: #{pointwise_linear.1} parent=11 // pred_fallthru
        _
    $region12: #{pointwise_linear.1} parent=5 // pred_fallthru
      _
    %p150 = scmp.lt.s32.totalorder %s9, 2
    // Predicated region
    $region21: #{pointwise_linear.1} parent=5 // pred_check
      %p151 = pneg %p150
    $region22: #{pointwise_linear.1} parent=5 // pred_check_branch
      %153 = sbr.rel (%p151) target = $region24
    $region23: #{pointwise_linear.1} parent=5 // pred_region
      // Predicated region
      $region25: #{pointwise_linear.1} parent=23 // pred_check
        %p154 = pneg %p43
      $region26: #{pointwise_linear.1} parent=23 // pred_check_branch
        %156 = sbr.rel (%p154) target = $region28
      $region27: #{pointwise_linear.1} parent=23 // pred_region
        %s157 = smul.u32 32, %s17
        %p158 = scmp.lt.s32.totalorder %s157, 63
        %s159 = scalar_select %p158, %s157, 63
        %p160 = scmp.lt.s32.totalorder %s16, 0
        %s161 = scalar_select %p160, %s16, 0
        %s162 = sadd.s32 %s161, %s159
        %s163 = smul.addr %s162, 8
        %s164 = scalar_lea.vmem %s0, %s163
        %s165 = smul.u32 32, %s17
      $region28: #{pointwise_linear.1} parent=23 // pred_fallthru
        _
    $region24: #{pointwise_linear.1} parent=5 // pred_fallthru
      _
    %p166 = scmp.le.s32.totalorder 1, %s9
    %p167 = scmp.lt.s32.totalorder %s9, 3
    %p168 = pnand %p166, %p167
    %p169 = pneg %p168
    // Predicated region
    $region29: #{pointwise_linear.1} parent=5 // pred_check
      _
    $region30: #{pointwise_linear.1} parent=5 // pred_check_branch
      %171 = sbr.rel (%p168) target = $region32
    $region31: #{pointwise_linear.1} parent=5 // pred_region
      %s172 = ssub.s32 %s9, 1
      %s173 = smul.u32 32, %s19
      %p174 = scmp.lt.s32.totalorder %s173, 63
      %s175 = scalar_select %p174, %s173, 63
      %p176 = scmp.lt.s32.totalorder %s18, 0
      %s177 = scalar_select %p176, %s18, 0
      %s178 = sadd.s32 %s177, %s175
      %s179 = smul.addr %s178, 8
      %s180 = scalar_lea.vmem %s0, %s179
      %p181 = pneg %p49
      %p182 = pneg %p46
      %p183 = scmp.lt.s32.totalorder %s18, 0
      %s184 = scalar_select %p183, %s18, 0
      %s185 = smul.addr %s184, 8
      %s186 = smul.addr %s185, 8
      %s187 = scalar_lea.vmem %s1, %s186
      %p188 = pneg %p75
      %p189 = pneg %p72
      %p190 = pneg %p96
      %p191 = pneg %p93
      %p192 = pneg %p124
      %p193 = pneg %p121
      %s194 = smul.u32 32, %s19
      %p195 = scmp.lt.s32.totalorder %s194, 63
      %s196 = scalar_select %p195, %s194, 63
      %p197 = scmp.lt.s32.totalorder %s18, 0
      %s198 = scalar_select %p197, %s18, 0
      %s199 = sadd.s32 %s198, %s196
      %s200 = smul.addr %s199, 8
      %s201 = scalar_lea.vmem %s3, %s200
      %s202 = smul.u32 32, %s19
      %p203 = scmp.lt.s32.totalorder %s202, 63
      %s204 = scalar_select %p203, %s202, 63
      %p205 = scmp.lt.s32.totalorder %s18, 0
      %s206 = scalar_select %p205, %s18, 0
      %s207 = sadd.s32 %s206, %s204
      %s208 = smul.addr %s207, 8
      %s209 = scalar_lea.vmem %s0, %s208
      %s210 = smul.u32 32, %s19
      %p211 = scmp.lt.s32.totalorder %s18, 0
      %s212 = scalar_select %p211, %s18, 0
      %s213 = smul.addr %s212, 8
      %s214 = smul.addr %s213, 8
      %s215 = scalar_lea.vmem %s1, %s214
      %s216 = smul.u32 32, %s19
      %p217 = scmp.lt.s32.totalorder %s216, 63
      %s218 = scalar_select %p217, %s216, 63
      %p219 = scmp.lt.s32.totalorder %s18, 0
      %s220 = scalar_select %p219, %s18, 0
      %s221 = sadd.s32 %s220, %s218
      %s222 = smul.addr %s221, 8
      %s223 = scalar_lea.vmem %s3, %s222
      %s224 = smul.u32 32, %s19
      %v225 = vld [vmem:[%s209] sm:$0xff]
      %v226 = vld [vmem:[%s209 + $0x8] sm:$0xff]
      %v227 = vld [vmem:[%s209 + $0x10] sm:$0xff]
      %v228 = vld [vmem:[%s209 + $0x18] sm:$0xff]
      %v229 = vld [vmem:[%s209 + $0x20] sm:$0xff]
      %v230 = vld [vmem:[%s209 + $0x28] sm:$0xff]
      %v231 = vld [vmem:[%s209 + $0x30] sm:$0xff]
      %v232 = vld [vmem:[%s209 + $0x38] sm:$0xff]
      %v233 = vld [vmem:[%s209 + $0x40] sm:$0xff]
      %v234 = vld [vmem:[%s209 + $0x48] sm:$0xff]
      %v235 = vld [vmem:[%s209 + $0x50] sm:$0xff]
      %v236 = vld [vmem:[%s209 + $0x58] sm:$0xff]
      %v237 = vld [vmem:[%s209 + $0x60] sm:$0xff]
      %v238 = vld [vmem:[%s209 + $0x68] sm:$0xff]
      %v239 = vld [vmem:[%s209 + $0x70] sm:$0xff]
      %v240 = vld [vmem:[%s209 + $0x78] sm:$0xff]
      %v241 = vld [vmem:[%s209 + $0x80] sm:$0xff]
      %v242 = vld [vmem:[%s209 + $0x88] sm:$0xff]
      %v243 = vld [vmem:[%s209 + $0x90] sm:$0xff]
      %v244 = vld [vmem:[%s209 + $0x98] sm:$0xff]
      %v245 = vld [vmem:[%s209 + $0xa0] sm:$0xff]
      %v246 = vld [vmem:[%s209 + $0xa8] sm:$0xff]
      %v247 = vld [vmem:[%s209 + $0xb0] sm:$0xff]
      %v248 = vld [vmem:[%s209 + $0xb8] sm:$0xff]
      %v249 = vld [vmem:[%s209 + $0xc0] sm:$0xff]
      %v250 = vld [vmem:[%s209 + $0xc8] sm:$0xff]
      %v251 = vld [vmem:[%s209 + $0xd0] sm:$0xff]
      %v252 = vld [vmem:[%s209 + $0xd8] sm:$0xff]
      %v253 = vld [vmem:[%s209 + $0xe0] sm:$0xff]
      %v254 = vld [vmem:[%s209 + $0xe8] sm:$0xff]
      %v255 = vld [vmem:[%s209 + $0xf0] sm:$0xff]
      %v256 = vld [vmem:[%s209 + $0xf8] sm:$0xff]
      %v257 = vld [vmem:[%s215] sm:$0xff]
      %v258 = vld [vmem:[%s215 + $0x8] sm:$0xff]
      %v259 = vld [vmem:[%s215 + $0x10] sm:$0xff]
      %v260 = vld [vmem:[%s215 + $0x18] sm:$0xff]
      %v261 = vld [vmem:[%s215 + $0x20] sm:$0xff]
      %v262 = vld [vmem:[%s215 + $0x28] sm:$0xff]
      %v263 = vld [vmem:[%s215 + $0x30] sm:$0xff]
      %v264 = vld [vmem:[%s215 + $0x38] sm:$0xff]
      %v265 = vld [vmem:[%s2] sm:$0x1]
      %v267 = vlaneseq
      %v268 = vshrl.u32 %v267, 7
      %v269 = vsub.s32 0, %v268
      %v270 = vrot.slane %v265, %v269
      %vm272 = vcmask 523264
      %v274 = vsel %vm272, %v225, 0
      %v277 = vsel %vm272, %v226, 0
      %v280 = vsel %vm272, %v227, 0
      %v283 = vsel %vm272, %v228, 0
      %v286 = vsel %vm272, %v229, 0
      %v289 = vsel %vm272, %v230, 0
      %v292 = vsel %vm272, %v231, 0
      %v295 = vsel %vm272, %v232, 0
      %v298 = vsel %vm272, %v233, 0
      %v301 = vsel %vm272, %v234, 0
      %v304 = vsel %vm272, %v235, 0
      %v307 = vsel %vm272, %v236, 0
      %v310 = vsel %vm272, %v237, 0
      %v313 = vsel %vm272, %v238, 0
      %v316 = vsel %vm272, %v239, 0
      %v319 = vsel %vm272, %v240, 0
      %v322 = vsel %vm272, %v241, 0
      %v325 = vsel %vm272, %v242, 0
      %v328 = vsel %vm272, %v243, 0
      %v331 = vsel %vm272, %v244, 0
      %v334 = vsel %vm272, %v245, 0
      %v337 = vsel %vm272, %v246, 0
      %v340 = vsel %vm272, %v247, 0
      %v343 = vsel %vm272, %v248, 0
      %v346 = vsel %vm272, %v249, 0
      %v349 = vsel %vm272, %v250, 0
      %v352 = vsel %vm272, %v251, 0
      %v355 = vsel %vm272, %v252, 0
      %v358 = vsel %vm272, %v253, 0
      %v361 = vsel %vm272, %v254, 0
      %v364 = vsel %vm272, %v255, 0
      %v367 = vsel %vm272, %v256, 0
      %369 = vmatprep.subr.mxu0 0.0
      %370 = vmatpush1.msra.mxu0 0.0
      %371 = vmatprep.subr.mxu0 0.0
      %372 = vmatpush1.msra.mxu0 0.0
      %373 = vmatprep.subr.mxu0 0.0
      %374 = vmatpush1.msra.mxu0 0.0
      %375 = vmatprep.subr.mxu0 0.0
      %376 = vmatpush1.msra.mxu0 0.0
      %377 = vmatprep.subr.mxu0 0.0
      %378 = vmatpush1.msra.mxu0 0.0
      %379 = vmatprep.subr.mxu0 0.0
      %380 = vmatpush1.msra.mxu0 0.0
      %381 = vmatprep.subr.mxu0 0.0
      %382 = vmatpush1.msra.mxu0 0.0
      %383 = vmatprep.subr.mxu0 0.0
      %384 = vmatpush1.msra.mxu0 0.0
      %385 = vmatprep.subr.mxu0 0.0
      %386 = vmatpush1.msra.mxu0 %v264
      %387 = vmatprep.subr.mxu0 0.0
      %388 = vmatpush1.msra.mxu0 %v263
      %389 = vmatprep.subr.mxu0 0.0
      %390 = vmatpush1.msra.mxu0 %v262
      %391 = vmatprep.subr.mxu0 0.0
      %392 = vmatpush1.msra.mxu0 %v261
      %393 = vmatprep.subr.mxu0 0.0
      %394 = vmatpush1.msra.mxu0 %v260
      %395 = vmatprep.subr.mxu0 0.0
      %396 = vmatpush1.msra.mxu0 %v259
      %397 = vmatprep.subr.mxu0 0.0
      %398 = vmatpush1.msra.mxu0 %v258
      %399 = vmatprep.subr.mxu0 0.0
      %400 = vmatpush1.msra.mxu0 %v257
      %401 = vmatprep.subr.mxu0 0.0
      %402 = vmatpush2.msra.mxu0 0.0
      %403 = vmatprep.subr.mxu0 0.0
      %404 = vmatpush2.msra.mxu0 0.0
      %405 = vmatprep.subr.mxu0 0.0
      %406 = vmatpush2.msra.mxu0 0.0
      %407 = vmatprep.subr.mxu0 0.0
      %408 = vmatpush2.msra.mxu0 0.0
      %409 = vmatprep.subr.mxu0 0.0
      %410 = vmatpush2.msra.mxu0 0.0
      %411 = vmatprep.subr.mxu0 0.0
      %412 = vmatpush2.msra.mxu0 0.0
      %413 = vmatprep.subr.mxu0 0.0
      %414 = vmatpush2.msra.mxu0 0.0
      %415 = vmatprep.subr.mxu0 0.0
      %416 = vmatpush2.msra.mxu0 0.0
      %417 = vmatprep.subr.mxu0 0.0
      %418 = vmatpush2.msra.mxu0 0.0
      %419 = vmatprep.subr.mxu0 0.0
      %420 = vmatpush2.msra.mxu0 0.0
      %421 = vmatprep.subr.mxu0 0.0
      %422 = vmatpush2.msra.mxu0 0.0
      %423 = vmatprep.subr.mxu0 0.0
      %424 = vmatpush2.msra.mxu0 0.0
      %425 = vmatprep.subr.mxu0 0.0
      %426 = vmatpush2.msra.mxu0 0.0
      %427 = vmatprep.subr.mxu0 0.0
      %428 = vmatpush2.msra.mxu0 0.0
      %429 = vmatprep.subr.mxu0 0.0
      %430 = vmatpush2.msra.mxu0 0.0
      %431 = vmatprep.subr.mxu0 0.0
      %432 = vmatpush2.msra.mxu0 0.0
      %433 = vmatprep.mubr.f32.mxu0 0.0
      %434 = vmatmul.mubr.f32.gmra.mxu0 %v274
      %v435 = vpop.f32.mrf.mxu0
      %v436 = vadd.f32 %v270, %v435
      %v437 = vpop.f32.mrf.mxu0
      %438 = vmatprep.mubr.f32.mxu0 0.0
      %439 = vmatmul.mubr.f32.gmra.mxu0 %v277
      %v440 = vpop.f32.mrf.mxu0
      %v441 = vadd.f32 %v270, %v440
      %v442 = vpop.f32.mrf.mxu0
      %443 = vmatprep.mubr.f32.mxu0 0.0
      %444 = vmatmul.mubr.f32.gmra.mxu0 %v280
      %v445 = vpop.f32.mrf.mxu0
      %v446 = vadd.f32 %v270, %v445
      %v447 = vpop.f32.mrf.mxu0
      %448 = vmatprep.mubr.f32.mxu0 0.0
      %449 = vmatmul.mubr.f32.gmra.mxu0 %v283
      %v450 = vpop.f32.mrf.mxu0
      %v451 = vadd.f32 %v270, %v450
      %v452 = vpop.f32.mrf.mxu0
      %453 = vmatprep.mubr.f32.mxu0 0.0
      %454 = vmatmul.mubr.f32.gmra.mxu0 %v286
      %v455 = vpop.f32.mrf.mxu0
      %v456 = vadd.f32 %v270, %v455
      %v457 = vpop.f32.mrf.mxu0
      %458 = vmatprep.mubr.f32.mxu0 0.0
      %459 = vmatmul.mubr.f32.gmra.mxu0 %v289
      %v460 = vpop.f32.mrf.mxu0
      %v461 = vadd.f32 %v270, %v460
      %v462 = vpop.f32.mrf.mxu0
      %463 = vmatprep.mubr.f32.mxu0 0.0
      %464 = vmatmul.mubr.f32.gmra.mxu0 %v292
      %v465 = vpop.f32.mrf.mxu0
      %v466 = vadd.f32 %v270, %v465
      %v467 = vpop.f32.mrf.mxu0
      %468 = vmatprep.mubr.f32.mxu0 0.0
      %469 = vmatmul.mubr.f32.gmra.mxu0 %v295
      %v470 = vpop.f32.mrf.mxu0
      %v471 = vadd.f32 %v270, %v470
      %v472 = vpop.f32.mrf.mxu0
      %473 = vmatprep.mubr.f32.mxu0 0.0
      %474 = vmatmul.mubr.f32.gmra.mxu0 %v298
      %v475 = vpop.f32.mrf.mxu0
      %v476 = vadd.f32 %v270, %v475
      %v477 = vpop.f32.mrf.mxu0
      %478 = vmatprep.mubr.f32.mxu0 0.0
      %479 = vmatmul.mubr.f32.gmra.mxu0 %v301
      %v480 = vpop.f32.mrf.mxu0
      %v481 = vadd.f32 %v270, %v480
      %v482 = vpop.f32.mrf.mxu0
      %483 = vmatprep.mubr.f32.mxu0 0.0
      %484 = vmatmul.mubr.f32.gmra.mxu0 %v304
      %v485 = vpop.f32.mrf.mxu0
      %v486 = vadd.f32 %v270, %v485
      %v487 = vpop.f32.mrf.mxu0
      %488 = vmatprep.mubr.f32.mxu0 0.0
      %489 = vmatmul.mubr.f32.gmra.mxu0 %v307
      %v490 = vpop.f32.mrf.mxu0
      %v491 = vadd.f32 %v270, %v490
      %v492 = vpop.f32.mrf.mxu0
      %493 = vmatprep.mubr.f32.mxu0 0.0
      %494 = vmatmul.mubr.f32.gmra.mxu0 %v310
      %v495 = vpop.f32.mrf.mxu0
      %v496 = vadd.f32 %v270, %v495
      %v497 = vpop.f32.mrf.mxu0
      %498 = vmatprep.mubr.f32.mxu0 0.0
      %499 = vmatmul.mubr.f32.gmra.mxu0 %v313
      %v500 = vpop.f32.mrf.mxu0
      %v501 = vadd.f32 %v270, %v500
      %v502 = vpop.f32.mrf.mxu0
      %503 = vmatprep.mubr.f32.mxu0 0.0
      %504 = vmatmul.mubr.f32.gmra.mxu0 %v316
      %v505 = vpop.f32.mrf.mxu0
      %v506 = vadd.f32 %v270, %v505
      %v507 = vpop.f32.mrf.mxu0
      %508 = vmatprep.mubr.f32.mxu0 0.0
      %509 = vmatmul.mubr.f32.gmra.mxu0 %v319
      %v510 = vpop.f32.mrf.mxu0
      %v511 = vadd.f32 %v270, %v510
      %v512 = vpop.f32.mrf.mxu0
      %513 = vmatprep.mubr.f32.mxu0 0.0
      %514 = vmatmul.mubr.f32.gmra.mxu0 %v322
      %v515 = vpop.f32.mrf.mxu0
      %v516 = vadd.f32 %v270, %v515
      %v517 = vpop.f32.mrf.mxu0
      %518 = vmatprep.mubr.f32.mxu0 0.0
      %519 = vmatmul.mubr.f32.gmra.mxu0 %v325
      %v520 = vpop.f32.mrf.mxu0
      %v521 = vadd.f32 %v270, %v520
      %v522 = vpop.f32.mrf.mxu0
      %523 = vmatprep.mubr.f32.mxu0 0.0
      %524 = vmatmul.mubr.f32.gmra.mxu0 %v328
      %v525 = vpop.f32.mrf.mxu0
      %v526 = vadd.f32 %v270, %v525
      %v527 = vpop.f32.mrf.mxu0
      %528 = vmatprep.mubr.f32.mxu0 0.0
      %529 = vmatmul.mubr.f32.gmra.mxu0 %v331
      %v530 = vpop.f32.mrf.mxu0
      %v531 = vadd.f32 %v270, %v530
      %v532 = vpop.f32.mrf.mxu0
      %533 = vmatprep.mubr.f32.mxu0 0.0
      %534 = vmatmul.mubr.f32.gmra.mxu0 %v334
      %v535 = vpop.f32.mrf.mxu0
      %v536 = vadd.f32 %v270, %v535
      %v537 = vpop.f32.mrf.mxu0
      %538 = vmatprep.mubr.f32.mxu0 0.0
      %539 = vmatmul.mubr.f32.gmra.mxu0 %v337
      %v540 = vpop.f32.mrf.mxu0
      %v541 = vadd.f32 %v270, %v540
      %v542 = vpop.f32.mrf.mxu0
      %543 = vmatprep.mubr.f32.mxu0 0.0
      %544 = vmatmul.mubr.f32.gmra.mxu0 %v340
      %v545 = vpop.f32.mrf.mxu0
      %v546 = vadd.f32 %v270, %v545
      %v547 = vpop.f32.mrf.mxu0
      %548 = vmatprep.mubr.f32.mxu0 0.0
      %549 = vmatmul.mubr.f32.gmra.mxu0 %v343
      %v550 = vpop.f32.mrf.mxu0
      %v551 = vadd.f32 %v270, %v550
      %v552 = vpop.f32.mrf.mxu0
      %553 = vmatprep.mubr.f32.mxu0 0.0
      %554 = vmatmul.mubr.f32.gmra.mxu0 %v346
      %v555 = vpop.f32.mrf.mxu0
      %v556 = vadd.f32 %v270, %v555
      %v557 = vpop.f32.mrf.mxu0
      %558 = vmatprep.mubr.f32.mxu0 0.0
      %559 = vmatmul.mubr.f32.gmra.mxu0 %v349
      %v560 = vpop.f32.mrf.mxu0
      %v561 = vadd.f32 %v270, %v560
      %v562 = vpop.f32.mrf.mxu0
      %563 = vmatprep.mubr.f32.mxu0 0.0
      %564 = vmatmul.mubr.f32.gmra.mxu0 %v352
      %v565 = vpop.f32.mrf.mxu0
      %v566 = vadd.f32 %v270, %v565
      %v567 = vpop.f32.mrf.mxu0
      %568 = vmatprep.mubr.f32.mxu0 0.0
      %569 = vmatmul.mubr.f32.gmra.mxu0 %v355
      %v570 = vpop.f32.mrf.mxu0
      %v571 = vadd.f32 %v270, %v570
      %v572 = vpop.f32.mrf.mxu0
      %573 = vmatprep.mubr.f32.mxu0 0.0
      %574 = vmatmul.mubr.f32.gmra.mxu0 %v358
      %v575 = vpop.f32.mrf.mxu0
      %v576 = vadd.f32 %v270, %v575
      %v577 = vpop.f32.mrf.mxu0
      %578 = vmatprep.mubr.f32.mxu0 0.0
      %579 = vmatmul.mubr.f32.gmra.mxu0 %v361
      %v580 = vpop.f32.mrf.mxu0
      %v581 = vadd.f32 %v270, %v580
      %v582 = vpop.f32.mrf.mxu0
      %583 = vmatprep.mubr.f32.mxu0 0.0
      %584 = vmatmul.mubr.f32.gmra.mxu0 %v364
      %v585 = vpop.f32.mrf.mxu0
      %v586 = vadd.f32 %v270, %v585
      %v587 = vpop.f32.mrf.mxu0
      %588 = vmatprep.mubr.f32.mxu0 0.0
      %589 = vmatmul.mubr.f32.gmra.mxu0 %v367
      %v590 = vpop.f32.mrf.mxu0
      %v591 = vadd.f32 %v270, %v590
      %v592 = vpop.f32.mrf.mxu0
      %593 = vdwg.mxu0
      %594 = vst [vmem:[%s223] sm:$0xff] %v436
      %595 = vst [vmem:[%s223 + $0x8] sm:$0xff] %v441
      %596 = vst [vmem:[%s223 + $0x10] sm:$0xff] %v446
      %597 = vst [vmem:[%s223 + $0x18] sm:$0xff] %v451
      %598 = vst [vmem:[%s223 + $0x20] sm:$0xff] %v456
      %599 = vst [vmem:[%s223 + $0x28] sm:$0xff] %v461
      %600 = vst [vmem:[%s223 + $0x30] sm:$0xff] %v466
      %601 = vst [vmem:[%s223 + $0x38] sm:$0xff] %v471
      %602 = vst [vmem:[%s223 + $0x40] sm:$0xff] %v476
      %603 = vst [vmem:[%s223 + $0x48] sm:$0xff] %v481
      %604 = vst [vmem:[%s223 + $0x50] sm:$0xff] %v486
      %605 = vst [vmem:[%s223 + $0x58] sm:$0xff] %v491
      %606 = vst [vmem:[%s223 + $0x60] sm:$0xff] %v496
      %607 = vst [vmem:[%s223 + $0x68] sm:$0xff] %v501
      %608 = vst [vmem:[%s223 + $0x70] sm:$0xff] %v506
      %609 = vst [vmem:[%s223 + $0x78] sm:$0xff] %v511
      %610 = vst [vmem:[%s223 + $0x80] sm:$0xff] %v516
      %611 = vst [vmem:[%s223 + $0x88] sm:$0xff] %v521
      %612 = vst [vmem:[%s223 + $0x90] sm:$0xff] %v526
      %613 = vst [vmem:[%s223 + $0x98] sm:$0xff] %v531
      %614 = vst [vmem:[%s223 + $0xa0] sm:$0xff] %v536
      %615 = vst [vmem:[%s223 + $0xa8] sm:$0xff] %v541
      %616 = vst [vmem:[%s223 + $0xb0] sm:$0xff] %v546
      %617 = vst [vmem:[%s223 + $0xb8] sm:$0xff] %v551
      %618 = vst [vmem:[%s223 + $0xc0] sm:$0xff] %v556
      %619 = vst [vmem:[%s223 + $0xc8] sm:$0xff] %v561
      %620 = vst [vmem:[%s223 + $0xd0] sm:$0xff] %v566
      %621 = vst [vmem:[%s223 + $0xd8] sm:$0xff] %v571
      %622 = vst [vmem:[%s223 + $0xe0] sm:$0xff] %v576
      %623 = vst [vmem:[%s223 + $0xe8] sm:$0xff] %v581
      %624 = vst [vmem:[%s223 + $0xf0] sm:$0xff] %v586
      %625 = vst [vmem:[%s223 + $0xf8] sm:$0xff] %v591
      %s626 = smul.u32 32, %s19
      %p627 = scmp.lt.s32.totalorder %s626, 63
      %s628 = scalar_select %p627, %s626, 63
      %p629 = scmp.lt.s32.totalorder %s18, 0
      %s630 = scalar_select %p629, %s18, 0
      %s631 = sadd.s32 %s630, %s628
      %s632 = smul.addr %s631, 8
      %s633 = scalar_lea.vmem %s3, %s632
      // Predicated region
      $region33: #{pointwise_linear.1} parent=31 // pred_check
        %p634 = pneg %p121
      $region34: #{pointwise_linear.1} parent=31 // pred_check_branch
        %636 = sbr.rel (%p634) target = $region36
      $region35: #{pointwise_linear.1} parent=31 // pred_region
        %s637 = smul.u32 32, %s19
      $region36: #{pointwise_linear.1} parent=31 // pred_fallthru
        _
    $region32: #{pointwise_linear.1} parent=5 // pred_fallthru
      _
    %p638 = scmp.le.s32.totalorder 2, %s9
    // Predicated region
    $region37: #{pointwise_linear.1} parent=5 // pred_check
      %p639 = pneg %p638
    $region38: #{pointwise_linear.1} parent=5 // pred_check_branch
      %641 = sbr.rel (%p639) target = $region40
    $region39: #{pointwise_linear.1} parent=5 // pred_region
      %s642 = ssub.s32 %s9, 2
      // Predicated region
      $region41: #{pointwise_linear.1} parent=39 // pred_check
        %p643 = pneg %p127
      $region42: #{pointwise_linear.1} parent=39 // pred_check_branch
        %645 = sbr.rel (%p643) target = $region44
      $region43: #{pointwise_linear.1} parent=39 // pred_region
        %s646 = smul.u32 32, %s21
        %p647 = scmp.lt.s32.totalorder %s646, 63
        %s648 = scalar_select %p647, %s646, 63
        %p649 = scmp.lt.s32.totalorder %s20, 0
        %s650 = scalar_select %p649, %s20, 0
        %s651 = sadd.s32 %s650, %s648
        %s652 = smul.addr %s651, 8
        %s653 = scalar_lea.vmem %s3, %s652
      $region44: #{pointwise_linear.1} parent=39 // pred_fallthru
        _
    $region40: #{pointwise_linear.1} parent=5 // pred_fallthru
      _
  $region6: #{pointwise_linear.1} parent=0 // loop_footer
    %s13 = sadd.s32 1, %s9
  $region7: #{pointwise_linear.1} parent=0 // loop_footer_branch
    %8 = sbr.rel target = $region3
  $region8: #{pointwise_linear.1} parent=0 // loop_exit
    _

</llo_original>
